<compile_context>
chip_gen: v6e
topology: v6e:2x2x1
jax: 0.10.0
libtpu: 0.0.40
codegen_flags: <defaults>
</compile_context>

<pallas_src>
import jax
import jax.numpy as jnp
from jax.experimental import pallas as pl
from jax.experimental.pallas import tpu as pltpu


def _node_score_kernel(adj_ref, z_ref, b_ref, o_ref):
    # adj_ref: (1, TN, Np)  row tile of the adjacency for one batch element
    # z_ref:   (1, 1, Np)   projected features z = x @ W for the same batch
    # b_ref:   (1, 1)       bias, scalar in SMEM (no padded VMEM tile / DMA)
    # o_ref:   (1, TN, 1)   per-row scores (sublane layout; wrapper reshapes)
    adj = adj_ref[0].astype(jnp.float32)                  # (TN, Np)
    z = z_ref[0].astype(jnp.float32)                      # (1, Np) lane bcast
    # Batched mat-vec as a VPU multiply + XLU lane reduce: keeps the MXU
    # free and uses otherwise idle VLIW slots; f32 accumulation.
    score = jnp.sum(adj * z, axis=-1, keepdims=True)      # (TN, 1)
    o_ref[0] = (score + b_ref[0, 0]).astype(o_ref.dtype)


def _round_up(v, m):
    return -(-v // m) * m


def node_score(x, adj, w, b, *, max_tile_bytes=8 * 1024 * 1024):
    """x: (B, N, F), adj: (B, N, N), w: (F, 1), b: (1, 1) -> (B, N) f32."""
    B, N, F = x.shape
    assert adj.shape == (B, N, N)
    assert w.shape == (F, 1) and b.shape == (1, 1)

    # Reassociated projection (tiny: 2*B*N*F flops), hoisted to the wrapper.
    z = jnp.einsum("bnf,fo->bno", x, w,
                   preferred_element_type=jnp.float32)[..., 0]      # (B, N)

    # Pad the node dim to a multiple of 128 so all tiles are lane-dense and
    # unmasked.  Zero-padded adj columns x zero-padded z rows contribute 0;
    # padded output rows are sliced away below.
    Np = max(128, _round_up(N, 128))
    pad = Np - N
    if pad:
        adj = jnp.pad(adj, ((0, 0), (0, pad), (0, pad)))
        z = jnp.pad(z, ((0, 0), (0, pad)))
    z = z[:, None, :].astype(adj.dtype)                             # (B, 1, Np)
    bias = b.astype(jnp.float32).reshape(1, 1)

    # Row-tile size: a multiple of 128 that divides Np and keeps the
    # double-buffered adj tile comfortably inside scoped VMEM on all of
    # v5e / v6e (128 MiB physical) and v7x (64 MiB physical).
    itemsize = adj.dtype.itemsize
    TN = 128
    for cand in range(min(Np, 512), 127, -128):
        if Np % cand == 0 and cand * Np * itemsize <= max_tile_bytes:
            TN = cand
            break
    n_tiles = Np // TN

    flops = 2 * B * Np * Np + 2 * B * N * F
    bytes_accessed = (adj.size * itemsize + z.size * z.dtype.itemsize
                      + B * Np * 4 + bias.size * 4)

    out = pl.pallas_call(
        _node_score_kernel,
        out_shape=jax.ShapeDtypeStruct((B, Np, 1), jnp.float32),
        grid=(B, n_tiles),
        in_specs=[
            # adj streamed as (TN, Np) row tiles (the only big HBM traffic).
            pl.BlockSpec((1, TN, Np), lambda bb, i: (bb, i, 0)),
            # z stays resident across the row-tile axis (same block for all i).
            pl.BlockSpec((1, 1, Np), lambda bb, i: (bb, 0, 0)),
            # bias as a scalar in SMEM.
            pl.BlockSpec(memory_space=pltpu.MemorySpace.SMEM),
        ],
        # (TN, 1) sublane-oriented output block: sublane dim is 8-divisible
        # and lane dim equals the full (size-1) trailing dim; no relayout
        # needed in-kernel and output bytes are negligible vs adj.
        out_specs=pl.BlockSpec((1, TN, 1), lambda bb, i: (bb, i, 0)),
        compiler_params=pltpu.CompilerParams(
            dimension_semantics=("parallel", "parallel"),
            vmem_limit_bytes=48 * 1024 * 1024,
        ),
        cost_estimate=pl.CostEstimate(
            flops=flops, transcendentals=0, bytes_accessed=bytes_accessed),
    )(adj, z, bias)

    return out[:, :N, 0]


def node_score_ref(x, adj, w, b):
    # Original (un-reassociated) math: (adj @ x) @ W + b, then squeeze.
    agg = jnp.einsum("bnm,bmf->bnf", adj, x)
    score = jnp.einsum("bnf,fo->bno", agg, w) + b[0, 0]
    return jnp.squeeze(score, axis=-1)


if __name__ == "__main__":
    key = jax.random.PRNGKey(0)
    B, N, F = 2, 16, 32  # batch, nodes, in_channels

    k_x, k_adj, k_w, k_b = jax.random.split(key, 4)
    x = jax.random.normal(k_x, (B, N, F), dtype=jnp.float32)

    # Symmetric, self-looped, row-normalized adjacency (typical GCN input).
    a = jax.random.uniform(k_adj, (B, N, N), dtype=jnp.float32)
    a = (a + jnp.swapaxes(a, 1, 2)) * 0.5 + jnp.eye(N)[None]
    adj = a / jnp.sum(a, axis=-1, keepdims=True)

    # Deterministic parameter init (shapes from GCNLayer(in_channels, 1)).
    bound = 1.0 / jnp.sqrt(jnp.float32(F))
    w = jax.random.uniform(k_w, (F, 1), minval=-bound, maxval=bound,
                           dtype=jnp.float32)
    b = jax.random.uniform(k_b, (1, 1), minval=-bound, maxval=bound,
                           dtype=jnp.float32)

    out = jax.block_until_ready(node_score(x, adj, w, b))
    ref = node_score_ref(x, adj, w, b)
    assert out.shape == (B, N)
    assert jnp.allclose(out, ref, atol=1e-5, rtol=1e-5)
    print("KERNEL_OK")
</pallas_src>

<mosaic_0001>
module attributes {stable_mosaic.version = 11 : i64} {
  func.func @_node_score_kernel(%arg0: i32, %arg1: i32, %arg2: memref<1x128x128xf32, #tpu.memory_space<vmem>>, %arg3: memref<1x1x128xf32, #tpu.memory_space<vmem>>, %arg4: memref<1x1xf32, #tpu.memory_space<smem>>, %arg5: memref<1x128x1xf32, #tpu.memory_space<vmem>>) attributes {dimension_semantics = [#tpu.dimension_semantics<parallel>, #tpu.dimension_semantics<parallel>], iteration_bounds = array<i64: 2, 1>, scalar_prefetch = 0 : i64, scratch_operands = 0 : i64, tpu.core_type = #tpu.core_type<tc>, window_params = [{transform_indices = @transform_0, window_bounds = array<i64: 1, 128, 128>}, {transform_indices = @transform_1, window_bounds = array<i64: 1, 1, 128>}, {transform_indices = @transform_2, window_bounds = array<i64: 1, 1>}, {transform_indices = @transform_3, window_bounds = array<i64: 1, 128, 1>}]} {
    %c0 = arith.constant 0 : index
    %c0_0 = arith.constant 0 : index
    %c0_1 = arith.constant 0 : index
    %0 = vector.load %arg2[%c0, %c0_0, %c0_1] : memref<1x128x128xf32, #tpu.memory_space<vmem>>, vector<1x128x128xf32>
    %1 = vector.shape_cast %0 : vector<1x128x128xf32> to vector<128x128xf32>
    %c0_2 = arith.constant 0 : index
    %c0_3 = arith.constant 0 : index
    %c0_4 = arith.constant 0 : index
    %2 = vector.load %arg3[%c0_2, %c0_3, %c0_4] : memref<1x1x128xf32, #tpu.memory_space<vmem>>, vector<1x1x128xf32>
    %3 = vector.shape_cast %2 : vector<1x1x128xf32> to vector<1x128xf32>
    %4 = vector.broadcast %3 : vector<1x128xf32> to vector<128x128xf32>
    %5 = arith.mulf %1, %4 : vector<128x128xf32>
    %cst = arith.constant dense<0.000000e+00> : vector<128xf32>
    %6 = vector.multi_reduction <add>, %5, %cst [1] : vector<128x128xf32> to vector<128xf32>
    %7 = vector.shape_cast %6 : vector<128xf32> to vector<128x1xf32>
    %c0_5 = arith.constant 0 : index
    %c0_6 = arith.constant 0 : index
    %8 = memref.load %arg4[%c0_5, %c0_6] : memref<1x1xf32, #tpu.memory_space<smem>>
    %9 = vector.broadcast %8 : f32 to vector<128x1xf32>
    %10 = arith.addf %7, %9 : vector<128x1xf32>
    %c0_7 = arith.constant 0 : index
    %c0_8 = arith.constant 0 : index
    %c0_9 = arith.constant 0 : index
    %11 = vector.load %arg5[%c0_7, %c0_8, %c0_9] : memref<1x128x1xf32, #tpu.memory_space<vmem>>, vector<1x128x1xf32>
    %12 = vector.shape_cast %11 : vector<1x128x1xf32> to vector<128x1xf32>
    %13 = vector.shape_cast %10 : vector<128x1xf32> to vector<1x128x1xf32>
    tpu.vector_store %arg5[%c0_7, %c0_8, %c0_9], %13 {strides = array<i32>} : memref<1x128x1xf32, #tpu.memory_space<vmem>>, vector<1x128x1xf32>,
    return
  }
  func.func @transform_0(%arg0: i32, %arg1: i32) -> (i32, i32, i32) {
    %c0_i32 = arith.constant 0 : i32
    %c0_i32_0 = arith.constant 0 : i32
    return %arg0, %arg1, %c0_i32 : i32, i32, i32
  }
  func.func @transform_1(%arg0: i32, %arg1: i32) -> (i32, i32, i32) {
    %c0_i32 = arith.constant 0 : i32
    %c0_i32_0 = arith.constant 0 : i32
    %c0_i32_1 = arith.constant 0 : i32
    return %arg0, %c0_i32, %c0_i32_0 : i32, i32, i32
  }
  func.func @transform_2(%arg0: i32, %arg1: i32) -> (i32, i32) {
    %c0_i32 = arith.constant 0 : i32
    %c0_i32_0 = arith.constant 0 : i32
    %c0_i32_1 = arith.constant 0 : i32
    return %c0_i32, %c0_i32_0 : i32, i32
  }
  func.func @transform_3(%arg0: i32, %arg1: i32) -> (i32, i32, i32) {
    %c0_i32 = arith.constant 0 : i32
    %c0_i32_0 = arith.constant 0 : i32
    return %arg0, %arg1, %c0_i32 : i32, i32, i32
  }
}

</mosaic_0001>

<llo_original>
// kernel: tpu_custom_call.1
$region0: #{tpu_custom_call.1}
  #allocation0 [shape = 'u32[]', space=smem, size = 0x4, offset = 0x4, fixed_abs, tag = 'smem constant byte address 0x4 - core index']
  #allocation1 [shape = 'u32[144,128]{1,0:T(1,128)}', space=vmem, size = 0x12000, scoped, tag = 'internal scratch']
  #allocation2 [shape = 'f32[1,1]{1,0:T(1,128)S(6)}', space=smem, size = 0x200, scoped, tag = 'scoped memory for tpu_custom_call.1']
  %s0 = inlined_call_operand.hbm [shape: f32[2,128,128], index: 0, kind: input, shape index: {}]
  %s1 = inlined_call_operand.vmem [shape: f32[2,1,128], index: 1, kind: input, shape index: {}]
  %s2 = inlined_call_operand.<no memory space> [shape: f32[1,1], index: 2, kind: input, shape index: {}]
  %s3 = inlined_call_operand.vmem [shape: f32[2,128,1], index: 3, kind: output, shape index: {}]
  %s4 = sld [smem:[#allocation0]]
  $region49: #{tpu_custom_call.1} parent=0
    _
  %s6 = ssub.s32 1, %s4
  %s7 = scalar_select 0, %s6, %s4
  %8 = sst [smem:[#allocation2]] %s2
  $region1: #{tpu_custom_call.1} parent=0
    #allocation3 [shape = 'u8[131072]{0}', space=vmem, size = 0x20000, scoped, tag = 'input window, operand 0']
    #allocation4 [shape = 's32[2]{0}', space=sflag, size = 0x8, scoped, tag = 'scoped memory for tpu_custom_call.1']
    %9 = vsyncpa [#allocation4], 0
    %s10 = scalar_lea.sflag [#allocation4], 1
    %11 = vsyncpa %s10, 0
    loop: start=0, step=1, limit=4
    $region2: #{tpu_custom_call.1} parent=1 // loop_pre_header
      _
    $region3: #{tpu_custom_call.1} parent=1 // loop_header
      %s13 = sphi 0, %s17
      %p14 = scmp.ge.s32.totalorder %s13, 4
      %s20 = sphi 0, %s32
      %s21 = sphi 0, %s28
      %s22 = sphi 0, %s20
      %s23 = sphi 0, %s21
      %s24 = sphi 0, %s22
      %s25 = sphi 0, %s23
      %s37 = sphi 0, %s39
      %s40 = sphi 0, %s37
      %s41 = sphi 0, %s40
      %s57 = sphi 0, %s41
      %s63 = sphi 0, %s65
      %s66 = sphi 0, %s63
      %s67 = sphi 0, %s66
      %s83 = sphi 0, %s67
      %s87 = sphi 0, %s87
      %s89 = sphi 0, %s87
      %s90 = sphi 0, %s89
      %s104 = sphi 0, %s90
      %s112 = sphi 0, %s114
      %s115 = sphi 0, %s112
      %s116 = sphi 0, %s115
      %s132 = sphi 0, %s116
    $region4: #{tpu_custom_call.1} parent=1 // loop_header_branch
      %16 = sbr.rel (%p14) target = $region8
    $region5: #{tpu_custom_call.1} parent=1 // loop_body
      %s18 = ssub.s32 %s13, 1
      %s19 = ssub.s32 %s13, 2
      %s26 = sadd.s32 1, %s21
      %p27 = scmp.ge.s32.totalorder %s26, 1
      %s28 = scalar_select %p27, 0, %s26
      %s29 = sadd.s32 1, %s20
      %s30 = scalar_select %p27, %s29, %s20
      %p31 = scmp.ge.s32.totalorder %s30, 2
      %s32 = scalar_select %p31, 0, %s30
      %s33 = ssub.s32 %s20, %s32
      %s34 = ssub.s32 %s21, %s28
      %s35 = sor.u32 %s33, %s34
      %p36 = scmp.eq.s32.totalorder %s35, 0
      %s38 = sadd.s32 %s37, 1
      %s39 = scalar_select %p36, %s37, %s38
      %p42 = pneg %p36
      %p43 = scmp.eq.s32.totalorder %s13, 1
      %p44 = por %p42, %p43
      %p45 = scmp.ne.s32.totalorder %s37, %s40
      %p46 = scmp.eq.s32.totalorder %s13, 0
      %p47 = por %p45, %p46
      %p48 = scmp.ne.s32.totalorder %s37, %s40
      %p49 = scmp.eq.s32.totalorder %s18, 1
      %p50 = por %p48, %p49
      %p51 = scmp.ne.s32.totalorder %s40, %s41
      %p52 = scmp.eq.s32.totalorder %s18, 0
      %p53 = por %p51, %p52
      %p54 = scmp.ne.s32.totalorder %s40, %s41
      %p55 = scmp.eq.s32.totalorder %s19, 1
      %p56 = por %p54, %p55
      %p58 = scmp.ne.s32.totalorder %s41, %s57
      %p59 = scmp.eq.s32.totalorder %s19, 0
      %p60 = por %p58, %p59
      %s61 = ssub.s32 %s20, %s32
      %p62 = scmp.eq.s32.totalorder %s61, 0
      %s64 = sadd.s32 %s63, 1
      %s65 = scalar_select %p62, %s63, %s64
      %p68 = pneg %p62
      %p69 = scmp.eq.s32.totalorder %s13, 1
      %p70 = por %p68, %p69
      %p71 = scmp.ne.s32.totalorder %s63, %s66
      %p72 = scmp.eq.s32.totalorder %s13, 0
      %p73 = por %p71, %p72
      %p74 = scmp.ne.s32.totalorder %s63, %s66
      %p75 = scmp.eq.s32.totalorder %s18, 1
      %p76 = por %p74, %p75
      %p77 = scmp.ne.s32.totalorder %s66, %s67
      %p78 = scmp.eq.s32.totalorder %s18, 0
      %p79 = por %p77, %p78
      %p80 = scmp.ne.s32.totalorder %s66, %s67
      %p81 = scmp.eq.s32.totalorder %s19, 1
      %p82 = por %p80, %p81
      %p84 = scmp.ne.s32.totalorder %s67, %s83
      %p85 = scmp.eq.s32.totalorder %s19, 0
      %p86 = por %p84, %p85
      %s88 = sadd.s32 %s87, 1
      %p91 = scmp.eq.s32.totalorder %s13, 1
      %p92 = scmp.ne.s32.totalorder %s87, %s89
      %p93 = scmp.eq.s32.totalorder %s13, 0
      %p94 = por %p92, %p93
      %p95 = scmp.ne.s32.totalorder %s87, %s89
      %p96 = scmp.eq.s32.totalorder %s18, 1
      %p97 = por %p95, %p96
      %p98 = scmp.ne.s32.totalorder %s89, %s90
      %p99 = scmp.eq.s32.totalorder %s18, 0
      %p100 = por %p98, %p99
      %p101 = scmp.ne.s32.totalorder %s89, %s90
      %p102 = scmp.eq.s32.totalorder %s19, 1
      %p103 = por %p101, %p102
      %p105 = scmp.ne.s32.totalorder %s90, %s104
      %p106 = scmp.eq.s32.totalorder %s19, 0
      %p107 = por %p105, %p106
      %s108 = ssub.s32 %s20, %s32
      %s109 = ssub.s32 %s21, %s28
      %s110 = sor.u32 %s108, %s109
      %p111 = scmp.eq.s32.totalorder %s110, 0
      %s113 = sadd.s32 %s112, 1
      %s114 = scalar_select %p111, %s112, %s113
      %p117 = pneg %p111
      %p118 = scmp.eq.s32.totalorder %s13, 1
      %p119 = por %p117, %p118
      %p120 = scmp.ne.s32.totalorder %s112, %s115
      %p121 = scmp.eq.s32.totalorder %s13, 0
      %p122 = por %p120, %p121
      %p123 = scmp.ne.s32.totalorder %s112, %s115
      %p124 = scmp.eq.s32.totalorder %s18, 1
      %p125 = por %p123, %p124
      %p126 = scmp.ne.s32.totalorder %s115, %s116
      %p127 = scmp.eq.s32.totalorder %s18, 0
      %p128 = por %p126, %p127
      %p129 = scmp.ne.s32.totalorder %s115, %s116
      %p130 = scmp.eq.s32.totalorder %s19, 1
      %p131 = por %p129, %p130
      %p133 = scmp.ne.s32.totalorder %s116, %s132
      %p134 = scmp.eq.s32.totalorder %s19, 0
      %p135 = por %p133, %p134
      %p136 = scmp.le.s32.totalorder 1, %s13
      %p137 = scmp.lt.s32.totalorder %s13, 3
      %p138 = pnand %p136, %p137
      %p139 = pneg %p138
      // Predicated region
      $region9: #{tpu_custom_call.1} parent=5 // pred_check
        _
      $region10: #{tpu_custom_call.1} parent=5 // pred_check_branch
        %141 = sbr.rel (%p138) target = $region12
      $region11: #{tpu_custom_call.1} parent=5 // pred_region
        %s142 = ssub.s32 %s13, 1
        // Predicated region
        $region13: #{tpu_custom_call.1} parent=11 // pred_check
          %p143 = pneg %p100
        $region14: #{tpu_custom_call.1} parent=11 // pred_check_branch
          %145 = sbr.rel (%p143) target = $region16
        $region15: #{tpu_custom_call.1} parent=11 // pred_region
          _
        $region16: #{tpu_custom_call.1} parent=11 // pred_fallthru
          _
      $region12: #{tpu_custom_call.1} parent=5 // pred_fallthru
        _
      %p146 = scmp.lt.s32.totalorder %s13, 2
      // Predicated region
      $region17: #{tpu_custom_call.1} parent=5 // pred_check
        %p147 = pneg %p146
      $region18: #{tpu_custom_call.1} parent=5 // pred_check_branch
        %149 = sbr.rel (%p147) target = $region20
      $region19: #{tpu_custom_call.1} parent=5 // pred_region
        // Predicated region
        $region21: #{tpu_custom_call.1} parent=19 // pred_check
          %p150 = pneg %p47
        $region22: #{tpu_custom_call.1} parent=19 // pred_check_branch
          %152 = sbr.rel (%p150) target = $region24
        $region23: #{tpu_custom_call.1} parent=19 // pred_region
          %s153 = sand.u32 %s37, 1
          %s154 = scalar_lea.sflag [#allocation4], %s153
          %s155 = sand.u32 %s37, 1
          %s156 = smul.addr %s155, 128
          %s157 = scalar_lea.vmem [#allocation3], %s156
          %s158 = smul.u32 16, %s21
          %s160 = ssub.s32 2048, 2048
          %161 = vsyncadd %s154, %s160
          %s162 = smul.addr %s20, 16
          %s163 = sadd.s32 %s158, %s162
          %s164 = smul.addr %s163, 128
          %s165 = scalar_lea.hbm %s0, %s164
          %s166 = sshll.u32 %s157, 4
          %s167 = int_to_ptr.vmem [resolvable:$true] %s166
          %172 = dma.hbm_to_vmem [thread:$0]  %s165, 2048, %s167, %s154, 128, 128, 8
        $region24: #{tpu_custom_call.1} parent=19 // pred_fallthru
          _
        // Predicated region
        $region25: #{tpu_custom_call.1} parent=19 // pred_check
          %p173 = pneg %p73
        $region26: #{tpu_custom_call.1} parent=19 // pred_check_branch
          %175 = sbr.rel (%p173) target = $region28
        $region27: #{tpu_custom_call.1} parent=19 // pred_region
          %p176 = scmp.lt.s32.totalorder %s20, 1
          %s177 = scalar_select %p176, %s20, 1
          %s178 = scalar_lea.vmem %s1, %s177
        $region28: #{tpu_custom_call.1} parent=19 // pred_fallthru
          _
      $region20: #{tpu_custom_call.1} parent=5 // pred_fallthru
        _
      %p179 = scmp.le.s32.totalorder 1, %s13
      %p180 = scmp.lt.s32.totalorder %s13, 3
      %p181 = pnand %p179, %p180
      %p182 = pneg %p181
      // Predicated region
      $region29: #{tpu_custom_call.1} parent=5 // pred_check
        _
      $region30: #{tpu_custom_call.1} parent=5 // pred_check_branch
        %184 = sbr.rel (%p181) target = $region32
      $region31: #{tpu_custom_call.1} parent=5 // pred_region
        %s185 = ssub.s32 %s13, 1
        %s186 = sand.u32 %s40, 1
        %s187 = scalar_lea.sflag [#allocation4], %s186
        %s188 = sand.u32 %s40, 1
        %s189 = smul.addr %s188, 128
        %s190 = scalar_lea.vmem [#allocation3], %s189
        // Predicated region
        $region33: #{tpu_custom_call.1} parent=31 // pred_check
          %p191 = pneg %p53
        $region34: #{tpu_custom_call.1} parent=31 // pred_check_branch
          %193 = sbr.rel (%p191) target = $region36
        $region35: #{tpu_custom_call.1} parent=31 // pred_region
          %194 = dma.done %s187, 2048
        $region36: #{tpu_custom_call.1} parent=31 // pred_fallthru
          _
        %s195 = sand.u32 %s40, 1
        %s196 = scalar_lea.sflag [#allocation4], %s195
        %s197 = sand.u32 %s40, 1
        %s198 = smul.addr %s197, 128
        %s199 = scalar_lea.vmem [#allocation3], %s198
        %p200 = pneg %p53
        %p201 = pneg %p50
        %p202 = scmp.lt.s32.totalorder %s22, 1
        %s203 = scalar_select %p202, %s22, 1
        %s204 = scalar_lea.vmem %s1, %s203
        %p205 = pneg %p79
        %p206 = pneg %p76
        %p207 = pneg %p100
        %p208 = pneg %p97
        %p209 = pneg %p128
        %p210 = pneg %p125
        %s211 = smul.u32 16, %s23
        %p212 = scmp.lt.s32.totalorder %s22, 1
        %s213 = scalar_select %p212, %s22, 1
        %p214 = scmp.lt.s32.totalorder %s211, 15
        %s215 = scalar_select %p214, %s211, 15
        %s216 = smul.addr %s213, 16
        %s217 = sadd.s32 %s215, %s216
        %s218 = smul.addr %s217, 8
        %s219 = scalar_lea.vmem %s3, %s218
        %s220 = smul.u32 16, %s23
        %p221 = scmp.lt.s32.totalorder %s22, 1
        %s222 = scalar_select %p221, %s22, 1
        %s223 = scalar_lea.vmem %s1, %s222
        %s224 = smul.u32 16, %s23
        %p225 = scmp.lt.s32.totalorder %s22, 1
        %s226 = scalar_select %p225, %s22, 1
        %p227 = scmp.lt.s32.totalorder %s224, 15
        %s228 = scalar_select %p227, %s224, 15
        %s229 = smul.addr %s226, 16
        %s230 = sadd.s32 %s228, %s229
        %s231 = smul.addr %s230, 8
        %s232 = scalar_lea.vmem %s3, %s231
        %s233 = smul.u32 16, %s23
        %v234 = vld [vmem:[%s190] sm:$0xff]
        %v235 = vld [vmem:[%s190 + $0x8] sm:$0xff]
        %v236 = vld [vmem:[%s190 + $0x10] sm:$0xff]
        %v237 = vld [vmem:[%s190 + $0x18] sm:$0xff]
        %v238 = vld [vmem:[%s190 + $0x20] sm:$0xff]
        %v239 = vld [vmem:[%s190 + $0x28] sm:$0xff]
        %v240 = vld [vmem:[%s190 + $0x30] sm:$0xff]
        %v241 = vld [vmem:[%s190 + $0x38] sm:$0xff]
        %v242 = vld [vmem:[%s190 + $0x40] sm:$0xff]
        %v243 = vld [vmem:[%s190 + $0x48] sm:$0xff]
        %v244 = vld [vmem:[%s190 + $0x50] sm:$0xff]
        %v245 = vld [vmem:[%s190 + $0x58] sm:$0xff]
        %v246 = vld [vmem:[%s190 + $0x60] sm:$0xff]
        %v247 = vld [vmem:[%s190 + $0x68] sm:$0xff]
        %v248 = vld [vmem:[%s190 + $0x70] sm:$0xff]
        %v249 = vld [vmem:[%s190 + $0x78] sm:$0xff]
        %v250 = vld [vmem:[%s223] sm:$0x1]
        %v252 = vlaneseq
        %v253 = vshrl.u32 %v252, 7
        %v254 = vsub.s32 0, %v253
        %v255 = vrot.slane %v250, %v254
        %v257 = vmul.f32 %v234, %v255
        %v258 = vmul.f32 %v235, %v255
        %v259 = vmul.f32 %v236, %v255
        %v260 = vmul.f32 %v237, %v255
        %v261 = vmul.f32 %v238, %v255
        %v262 = vmul.f32 %v239, %v255
        %v263 = vmul.f32 %v240, %v255
        %v264 = vmul.f32 %v241, %v255
        %v265 = vmul.f32 %v242, %v255
        %v266 = vmul.f32 %v243, %v255
        %v267 = vmul.f32 %v244, %v255
        %v268 = vmul.f32 %v245, %v255
        %v269 = vmul.f32 %v246, %v255
        %v270 = vmul.f32 %v247, %v255
        %v271 = vmul.f32 %v248, %v255
        %v272 = vmul.f32 %v249, %v255
        %273 = vadd.xlane.f32.xlu0 %v257
        %v274 = vpop.xlane.xlu0 %273
        %275 = vadd.xlane.f32.xlu0 %v258
        %v276 = vpop.xlane.xlu0 %275
        %277 = vadd.xlane.f32.xlu0 %v259
        %v278 = vpop.xlane.xlu0 %277
        %279 = vadd.xlane.f32.xlu0 %v260
        %v280 = vpop.xlane.xlu0 %279
        %281 = vadd.xlane.f32.xlu0 %v261
        %v282 = vpop.xlane.xlu0 %281
        %283 = vadd.xlane.f32.xlu0 %v262
        %v284 = vpop.xlane.xlu0 %283
        %285 = vadd.xlane.f32.xlu0 %v263
        %v286 = vpop.xlane.xlu0 %285
        %287 = vadd.xlane.f32.xlu0 %v264
        %v288 = vpop.xlane.xlu0 %287
        %289 = vadd.xlane.f32.xlu0 %v265
        %v290 = vpop.xlane.xlu0 %289
        %291 = vadd.xlane.f32.xlu0 %v266
        %v292 = vpop.xlane.xlu0 %291
        %293 = vadd.xlane.f32.xlu0 %v267
        %v294 = vpop.xlane.xlu0 %293
        %295 = vadd.xlane.f32.xlu0 %v268
        %v296 = vpop.xlane.xlu0 %295
        %297 = vadd.xlane.f32.xlu0 %v269
        %v298 = vpop.xlane.xlu0 %297
        %299 = vadd.xlane.f32.xlu0 %v270
        %v300 = vpop.xlane.xlu0 %299
        %301 = vadd.xlane.f32.xlu0 %v271
        %v302 = vpop.xlane.xlu0 %301
        %303 = vadd.xlane.f32.xlu0 %v272
        %v304 = vpop.xlane.xlu0 %303
        %s305 = sld [smem:[#allocation2]]
        %v306 = vstv %s305
        %v307 = vadd.f32 %v274, %v306
        %v308 = vadd.f32 %v276, %v306
        %v309 = vadd.f32 %v278, %v306
        %v310 = vadd.f32 %v280, %v306
        %v311 = vadd.f32 %v282, %v306
        %v312 = vadd.f32 %v284, %v306
        %v313 = vadd.f32 %v286, %v306
        %v314 = vadd.f32 %v288, %v306
        %v315 = vadd.f32 %v290, %v306
        %v316 = vadd.f32 %v292, %v306
        %v317 = vadd.f32 %v294, %v306
        %v318 = vadd.f32 %v296, %v306
        %v319 = vadd.f32 %v298, %v306
        %v320 = vadd.f32 %v300, %v306
        %v321 = vadd.f32 %v302, %v306
        %v322 = vadd.f32 %v304, %v306
        %vm323 = vcmask 7168
        %324 = vst.msk [vmem:[%s232] sm:$0xff] %vm323, %v307
        %325 = vst.msk [vmem:[%s232 + $0x8] sm:$0xff] %vm323, %v308
        %326 = vst.msk [vmem:[%s232 + $0x10] sm:$0xff] %vm323, %v309
        %327 = vst.msk [vmem:[%s232 + $0x18] sm:$0xff] %vm323, %v310
        %328 = vst.msk [vmem:[%s232 + $0x20] sm:$0xff] %vm323, %v311
        %329 = vst.msk [vmem:[%s232 + $0x28] sm:$0xff] %vm323, %v312
        %330 = vst.msk [vmem:[%s232 + $0x30] sm:$0xff] %vm323, %v313
        %331 = vst.msk [vmem:[%s232 + $0x38] sm:$0xff] %vm323, %v314
        %332 = vst.msk [vmem:[%s232 + $0x40] sm:$0xff] %vm323, %v315
        %333 = vst.msk [vmem:[%s232 + $0x48] sm:$0xff] %vm323, %v316
        %334 = vst.msk [vmem:[%s232 + $0x50] sm:$0xff] %vm323, %v317
        %335 = vst.msk [vmem:[%s232 + $0x58] sm:$0xff] %vm323, %v318
        %336 = vst.msk [vmem:[%s232 + $0x60] sm:$0xff] %vm323, %v319
        %337 = vst.msk [vmem:[%s232 + $0x68] sm:$0xff] %vm323, %v320
        %338 = vst.msk [vmem:[%s232 + $0x70] sm:$0xff] %vm323, %v321
        %339 = vst.msk [vmem:[%s232 + $0x78] sm:$0xff] %vm323, %v322
        %s340 = smul.u32 16, %s23
        %p341 = scmp.lt.s32.totalorder %s22, 1
        %s342 = scalar_select %p341, %s22, 1
        %p343 = scmp.lt.s32.totalorder %s340, 15
        %s344 = scalar_select %p343, %s340, 15
        %s345 = smul.addr %s342, 16
        %s346 = sadd.s32 %s344, %s345
        %s347 = smul.addr %s346, 8
        %s348 = scalar_lea.vmem %s3, %s347
        // Predicated region
        $region37: #{tpu_custom_call.1} parent=31 // pred_check
          %p349 = pneg %p125
        $region38: #{tpu_custom_call.1} parent=31 // pred_check_branch
          %351 = sbr.rel (%p349) target = $region40
        $region39: #{tpu_custom_call.1} parent=31 // pred_region
          %s352 = smul.u32 16, %s23
        $region40: #{tpu_custom_call.1} parent=31 // pred_fallthru
          _
      $region32: #{tpu_custom_call.1} parent=5 // pred_fallthru
        _
      %p353 = scmp.le.s32.totalorder 2, %s13
      // Predicated region
      $region41: #{tpu_custom_call.1} parent=5 // pred_check
        %p354 = pneg %p353
      $region42: #{tpu_custom_call.1} parent=5 // pred_check_branch
        %356 = sbr.rel (%p354) target = $region44
      $region43: #{tpu_custom_call.1} parent=5 // pred_region
        %s357 = ssub.s32 %s13, 2
        // Predicated region
        $region45: #{tpu_custom_call.1} parent=43 // pred_check
          %p358 = pneg %p131
        $region46: #{tpu_custom_call.1} parent=43 // pred_check_branch
          %360 = sbr.rel (%p358) target = $region48
        $region47: #{tpu_custom_call.1} parent=43 // pred_region
          %s361 = smul.u32 16, %s25
          %p362 = scmp.lt.s32.totalorder %s24, 1
          %s363 = scalar_select %p362, %s24, 1
          %p364 = scmp.lt.s32.totalorder %s361, 15
          %s365 = scalar_select %p364, %s361, 15
          %s366 = smul.addr %s363, 16
          %s367 = sadd.s32 %s365, %s366
          %s368 = smul.addr %s367, 8
          %s369 = scalar_lea.vmem %s3, %s368
        $region48: #{tpu_custom_call.1} parent=43 // pred_fallthru
          _
      $region44: #{tpu_custom_call.1} parent=5 // pred_fallthru
        _
    $region6: #{tpu_custom_call.1} parent=1 // loop_footer
      %s17 = sadd.s32 1, %s13
    $region7: #{tpu_custom_call.1} parent=1 // loop_footer_branch
      %12 = sbr.rel target = $region3
    $region8: #{tpu_custom_call.1} parent=1 // loop_exit
      _
    %370 = vsyncpa [#allocation4], 1
    %s371 = scalar_lea.sflag [#allocation4], 1
    %372 = vsyncpa %s371, 1

</llo_original>
